<compile_context>
chip_gen: v7x
topology: tpu7x:2x2x1
jax: 0.10.0
libtpu: 0.0.40
codegen_flags: <defaults>
</compile_context>

<pallas_src>
import functools

import jax
import jax.numpy as jnp
from jax import lax
from jax.experimental import pallas as pl
from jax.experimental.pallas import tpu as pltpu


def bigram_kernel(idx_ref, emb_ref, wih_ref, whh_ref, b_ref, wout_ref, bout_ref, out_ref,
                  *, seq_len):
    # idx_ref : (T*Bb, 1) int32, time-major within this batch block (row = t*Bb + b)
    # emb_ref : (V, E)
    # wih_ref : (E, 4H)   whh_ref: (H, 4H)   b_ref: (1, 4H)  (= b_ih + b_hh)
    # wout_ref: (H, V)    bout_ref: (1, V)
    # out_ref : (T*Bb, V) time-major logits slab for this batch block
    TB = idx_ref.shape[0]
    V = emb_ref.shape[0]
    H = whh_ref.shape[0]
    T = seq_len
    Bb = TB // T

    # --- Embedding lookup as one-hot matmul (MXU friendly): (T*Bb, V) @ (V, E) -> (T*Bb, E) ---
    idx_col = idx_ref[...]                                           # (T*Bb, 1) int32
    col_ids = lax.broadcasted_iota(jnp.int32, (TB, V), 1)            # (T*Bb, V)
    onehot = (col_ids == idx_col).astype(jnp.float32)                # (T*Bb, V)
    x = jnp.dot(onehot, emb_ref[...], preferred_element_type=jnp.float32)   # (T*Bb, E)

    # --- Input-side gate pre-activations for ALL (t, b) at once: (T*Bb, 4H) ---
    gx = jnp.dot(x, wih_ref[...], preferred_element_type=jnp.float32) + b_ref[...]

    whh = whh_ref[...]

    # --- LSTM recurrence on (Bb, H) carries, fully unrolled over T (PyTorch gate order i,f,g,o) ---
    h = jnp.zeros((Bb, H), jnp.float32)
    c = jnp.zeros((Bb, H), jnp.float32)
    hs = []
    for t in range(T):                                               # static unroll (T small)
        g = gx[t * Bb:(t + 1) * Bb, :] + jnp.dot(h, whh, preferred_element_type=jnp.float32)
        # One sigmoid on the full 4H = 128-lane slab (single EUP push) + tanh on the g-gate slice.
        s = jax.nn.sigmoid(g)                                        # (Bb, 4H)
        i_g = s[:, 0:H]
        f_g = s[:, H:2 * H]
        o_g = s[:, 3 * H:4 * H]
        g_g = jnp.tanh(g[:, 2 * H:3 * H])
        c = f_g * c + i_g * g_g
        h = o_g * jnp.tanh(c)
        hs.append(h)

    # --- Single hoisted output projection: (T*Bb, H) @ (H, V) + bias -> (T*Bb, V) ---
    h_all = jnp.concatenate(hs, axis=0)                              # (T*Bb, H) time-major
    out_ref[...] = (jnp.dot(h_all, wout_ref[...], preferred_element_type=jnp.float32)
                    + bout_ref[...])


def simple_bigram_forward(idx, emb_table, w_ih, w_hh, bias, w_out, b_out, *, batch_blocks=1):
    """idx: (B, T) int32 -> logits (B, T, V) float32.

    batch_blocks: number of independent batch blocks on the (parallel) grid axis.
    Keep 1 on single-TensorCore chips (v5e/v6e); set 2 on v7x to use both TensorCores
    (B must be divisible by batch_blocks).
    """
    B, T = idx.shape
    V, E = emb_table.shape
    H = w_hh.shape[0]
    assert B % batch_blocks == 0, "B must be divisible by batch_blocks"
    Bb = B // batch_blocks

    # Time-major flatten within each batch block so each recurrence step reads a contiguous
    # static sublane slice of the (T*Bb, 4H) input-gate matmul result (row = t*Bb + b).
    idx_tm = (idx.astype(jnp.int32)
              .reshape(batch_blocks, Bb, T)
              .transpose(0, 2, 1)
              .reshape(batch_blocks * T * Bb, 1))

    kernel = functools.partial(bigram_kernel, seq_len=T)

    grid_spec = pltpu.PrefetchScalarGridSpec(
        num_scalar_prefetch=0,
        grid=(batch_blocks,),                                 # independent batch blocks
        in_specs=[
            pl.BlockSpec((T * Bb, 1), lambda i: (i, 0)),      # idx (time-major, per block)
            pl.BlockSpec((V, E), lambda i: (0, 0)),           # embedding table
            pl.BlockSpec((E, 4 * H), lambda i: (0, 0)),       # W_ih^T
            pl.BlockSpec((H, 4 * H), lambda i: (0, 0)),       # W_hh^T
            pl.BlockSpec((1, 4 * H), lambda i: (0, 0)),       # b_ih + b_hh
            pl.BlockSpec((H, V), lambda i: (0, 0)),           # W_out^T
            pl.BlockSpec((1, V), lambda i: (0, 0)),           # b_out
        ],
        out_specs=pl.BlockSpec((T * Bb, V), lambda i: (i, 0)),
    )

    out_flat = pl.pallas_call(
        kernel,
        out_shape=jax.ShapeDtypeStruct((batch_blocks * T * Bb, V), jnp.float32),
        grid_spec=grid_spec,
        compiler_params=pltpu.CompilerParams(dimension_semantics=("parallel",)),
    )(idx_tm, emb_table, w_ih, w_hh, bias, w_out, b_out)

    # (nb*T*Bb, V) time-major -> (B, T, V): layout plumbing in the wrapper, not compute.
    logits = (out_flat
              .reshape(batch_blocks, T, Bb, V)
              .transpose(0, 2, 1, 3)
              .reshape(B, T, V))
    return logits


def reference_forward(idx, emb_table, w_ih, w_hh, bias, w_out, b_out):
    """Pure-JAX reference with identical semantics (PyTorch LSTM, gates i,f,g,o)."""
    x = emb_table[idx]                                               # (B, T, E)
    B, T, _ = x.shape
    H = w_hh.shape[0]

    def cell(carry, xt):
        h, c = carry
        g = xt @ w_ih + h @ w_hh + bias                              # (B, 4H)
        i_g = jax.nn.sigmoid(g[:, 0:H])
        f_g = jax.nn.sigmoid(g[:, H:2 * H])
        g_g = jnp.tanh(g[:, 2 * H:3 * H])
        o_g = jax.nn.sigmoid(g[:, 3 * H:4 * H])
        c = f_g * c + i_g * g_g
        h = o_g * jnp.tanh(c)
        return (h, c), h

    (_, _), hs = lax.scan(cell,
                          (jnp.zeros((B, H), jnp.float32), jnp.zeros((B, H), jnp.float32)),
                          jnp.swapaxes(x, 0, 1))
    h = jnp.swapaxes(hs, 0, 1)                                       # (B, T, H)
    return h @ w_out + b_out


if __name__ == "__main__":
    # Small shapes consistent with the module's forward (vocab, seq, embed, hidden).
    B, T = 2, 8
    VOCAB, N_EMBED, N_HIDDEN = 64, 32, 32

    key = jax.random.PRNGKey(0)
    k_idx, k_emb, k_wih, k_whh, k_bih, k_bhh, k_wout, k_bout = jax.random.split(key, 8)

    idx = jax.random.randint(k_idx, (B, T), 0, VOCAB, dtype=jnp.int32)

    scale = 0.1
    emb_table = scale * jax.random.normal(k_emb, (VOCAB, N_EMBED), jnp.float32)
    # PyTorch LSTM weights: weight_ih (4H, E), weight_hh (4H, H) — pre-transposed for x @ W.
    w_ih = scale * jax.random.normal(k_wih, (N_EMBED, 4 * N_HIDDEN), jnp.float32)
    w_hh = scale * jax.random.normal(k_whh, (N_HIDDEN, 4 * N_HIDDEN), jnp.float32)
    b_ih = scale * jax.random.normal(k_bih, (4 * N_HIDDEN,), jnp.float32)
    b_hh = scale * jax.random.normal(k_bhh, (4 * N_HIDDEN,), jnp.float32)
    bias = (b_ih + b_hh).reshape(1, 4 * N_HIDDEN)
    # nn.Linear(n_hidden, vocab): weight (V, H) — pre-transposed to (H, V).
    w_out = scale * jax.random.normal(k_wout, (N_HIDDEN, VOCAB), jnp.float32)
    b_out = scale * jax.random.normal(k_bout, (1, VOCAB), jnp.float32)

    logits = simple_bigram_forward(idx, emb_table, w_ih, w_hh, bias, w_out, b_out)
    logits = jax.block_until_ready(logits)

    ref = reference_forward(idx, emb_table, w_ih, w_hh, bias, w_out, b_out)
    assert logits.shape == (B, T, VOCAB)
    assert jnp.allclose(logits, ref, rtol=1e-5, atol=1e-5), "mismatch vs reference"

    print("KERNEL_OK")
</pallas_src>

<mosaic_0001>
module attributes {stable_mosaic.version = 11 : i64} {
  func.func @bigram_kernel(%arg0: i32, %arg1: memref<16x1xi32, #tpu.memory_space<vmem>>, %arg2: memref<64x32xf32, #tpu.memory_space<vmem>>, %arg3: memref<32x128xf32, #tpu.memory_space<vmem>>, %arg4: memref<32x128xf32, #tpu.memory_space<vmem>>, %arg5: memref<1x128xf32, #tpu.memory_space<vmem>>, %arg6: memref<32x64xf32, #tpu.memory_space<vmem>>, %arg7: memref<1x64xf32, #tpu.memory_space<vmem>>, %arg8: memref<16x64xf32, #tpu.memory_space<vmem>>) attributes {dimension_semantics = [#tpu.dimension_semantics<parallel>], iteration_bounds = array<i64: 1>, scalar_prefetch = 0 : i64, scratch_operands = 0 : i64, tpu.core_type = #tpu.core_type<tc>, window_params = [{transform_indices = @transform_0, window_bounds = array<i64: 16, 1>}, {pipeline_mode = #tpu.pipeline_mode<synchronous>, transform_indices = @transform_1, window_bounds = array<i64: 64, 32>}, {pipeline_mode = #tpu.pipeline_mode<synchronous>, transform_indices = @transform_2, window_bounds = array<i64: 32, 128>}, {pipeline_mode = #tpu.pipeline_mode<synchronous>, transform_indices = @transform_3, window_bounds = array<i64: 32, 128>}, {pipeline_mode = #tpu.pipeline_mode<synchronous>, transform_indices = @transform_4, window_bounds = array<i64: 1, 128>}, {pipeline_mode = #tpu.pipeline_mode<synchronous>, transform_indices = @transform_5, window_bounds = array<i64: 32, 64>}, {pipeline_mode = #tpu.pipeline_mode<synchronous>, transform_indices = @transform_6, window_bounds = array<i64: 1, 64>}, {transform_indices = @transform_7, window_bounds = array<i64: 16, 64>}]} {
    %c0 = arith.constant 0 : index
    %c0_0 = arith.constant 0 : index
    %0 = vector.load %arg1[%c0, %c0_0] : memref<16x1xi32, #tpu.memory_space<vmem>>, vector<16x1xi32>
    %1 = tpu.iota {dimensions = array<i32: 1>} : vector<16x64xi32>
    %2 = vector.broadcast %0 : vector<16x1xi32> to vector<16x64xi32>
    %3 = arith.cmpi eq, %1, %2 : vector<16x64xi32>
    %4 = arith.extui %3 : vector<16x64xi1> to vector<16x64xi32>
    %5 = arith.sitofp %4 : vector<16x64xi32> to vector<16x64xf32>
    %c0_1 = arith.constant 0 : index
    %c0_2 = arith.constant 0 : index
    %6 = vector.load %arg2[%c0_1, %c0_2] : memref<64x32xf32, #tpu.memory_space<vmem>>, vector<64x32xf32>
    %cst = arith.constant dense<0.000000e+00> : vector<16x32xf32>
    %7 = tpu.matmul %5, %6, %cst {dimension_numbers = #tpu.dot_dimension_numbers<[1], [0], [0], [1], [0, 0, 1, 1], [], []>} : vector<16x64xf32>, vector<64x32xf32>, vector<16x32xf32> -> vector<16x32xf32>
    %c0_3 = arith.constant 0 : index
    %c0_4 = arith.constant 0 : index
    %8 = vector.load %arg3[%c0_3, %c0_4] : memref<32x128xf32, #tpu.memory_space<vmem>>, vector<32x128xf32>
    %cst_5 = arith.constant dense<0.000000e+00> : vector<16x128xf32>
    %9 = tpu.matmul %7, %8, %cst_5 {dimension_numbers = #tpu.dot_dimension_numbers<[1], [0], [0], [1], [0, 0, 1, 1], [], []>} : vector<16x32xf32>, vector<32x128xf32>, vector<16x128xf32> -> vector<16x128xf32>
    %c0_6 = arith.constant 0 : index
    %c0_7 = arith.constant 0 : index
    %10 = vector.load %arg5[%c0_6, %c0_7] : memref<1x128xf32, #tpu.memory_space<vmem>>, vector<1x128xf32>
    %11 = vector.broadcast %10 : vector<1x128xf32> to vector<16x128xf32>
    %12 = arith.addf %9, %11 : vector<16x128xf32>
    %c0_8 = arith.constant 0 : index
    %c0_9 = arith.constant 0 : index
    %13 = vector.load %arg4[%c0_8, %c0_9] : memref<32x128xf32, #tpu.memory_space<vmem>>, vector<32x128xf32>
    %cst_10 = arith.constant 0.000000e+00 : f32
    %14 = vector.broadcast %cst_10 : f32 to vector<2x32xf32>
    %cst_11 = arith.constant 0.000000e+00 : f32
    %15 = vector.broadcast %cst_11 : f32 to vector<2x32xf32>
    %16 = vector.extract_strided_slice %12 {offsets = [0, 0], sizes = [2, 128], strides = [1, 1]} : vector<16x128xf32> to vector<2x128xf32>
    %cst_12 = arith.constant dense<0.000000e+00> : vector<2x128xf32>
    %17 = tpu.matmul %14, %13, %cst_12 {dimension_numbers = #tpu.dot_dimension_numbers<[1], [0], [0], [1], [0, 0, 1, 1], [], []>} : vector<2x32xf32>, vector<32x128xf32>, vector<2x128xf32> -> vector<2x128xf32>
    %18 = arith.addf %16, %17 : vector<2x128xf32>
    %19 = arith.negf %18 : vector<2x128xf32>
    %20 = math.exp %19 : vector<2x128xf32>
    %cst_13 = arith.constant 1.000000e+00 : f32
    %21 = vector.broadcast %cst_13 : f32 to vector<2x128xf32>
    %22 = arith.addf %21, %20 : vector<2x128xf32>
    %23 = arith.divf %21, %22 : vector<2x128xf32>
    %24 = vector.extract_strided_slice %23 {offsets = [0, 0], sizes = [2, 32], strides = [1, 1]} : vector<2x128xf32> to vector<2x32xf32>
    %25 = vector.extract_strided_slice %23 {offsets = [0, 32], sizes = [2, 32], strides = [1, 1]} : vector<2x128xf32> to vector<2x32xf32>
    %26 = vector.extract_strided_slice %23 {offsets = [0, 96], sizes = [2, 32], strides = [1, 1]} : vector<2x128xf32> to vector<2x32xf32>
    %27 = vector.extract_strided_slice %18 {offsets = [0, 64], sizes = [2, 32], strides = [1, 1]} : vector<2x128xf32> to vector<2x32xf32>
    %28 = math.tanh %27 : vector<2x32xf32>
    %29 = arith.mulf %25, %15 : vector<2x32xf32>
    %30 = arith.mulf %24, %28 : vector<2x32xf32>
    %31 = arith.addf %29, %30 : vector<2x32xf32>
    %32 = math.tanh %31 : vector<2x32xf32>
    %33 = arith.mulf %26, %32 : vector<2x32xf32>
    %34 = vector.extract_strided_slice %12 {offsets = [2, 0], sizes = [2, 128], strides = [1, 1]} : vector<16x128xf32> to vector<2x128xf32>
    %cst_14 = arith.constant dense<0.000000e+00> : vector<2x128xf32>
    %35 = tpu.matmul %33, %13, %cst_14 {dimension_numbers = #tpu.dot_dimension_numbers<[1], [0], [0], [1], [0, 0, 1, 1], [], []>} : vector<2x32xf32>, vector<32x128xf32>, vector<2x128xf32> -> vector<2x128xf32>
    %36 = arith.addf %34, %35 : vector<2x128xf32>
    %37 = arith.negf %36 : vector<2x128xf32>
    %38 = math.exp %37 : vector<2x128xf32>
    %cst_15 = arith.constant 1.000000e+00 : f32
    %39 = vector.broadcast %cst_15 : f32 to vector<2x128xf32>
    %40 = arith.addf %39, %38 : vector<2x128xf32>
    %41 = arith.divf %39, %40 : vector<2x128xf32>
    %42 = vector.extract_strided_slice %41 {offsets = [0, 0], sizes = [2, 32], strides = [1, 1]} : vector<2x128xf32> to vector<2x32xf32>
    %43 = vector.extract_strided_slice %41 {offsets = [0, 32], sizes = [2, 32], strides = [1, 1]} : vector<2x128xf32> to vector<2x32xf32>
    %44 = vector.extract_strided_slice %41 {offsets = [0, 96], sizes = [2, 32], strides = [1, 1]} : vector<2x128xf32> to vector<2x32xf32>
    %45 = vector.extract_strided_slice %36 {offsets = [0, 64], sizes = [2, 32], strides = [1, 1]} : vector<2x128xf32> to vector<2x32xf32>
    %46 = math.tanh %45 : vector<2x32xf32>
    %47 = arith.mulf %43, %31 : vector<2x32xf32>
    %48 = arith.mulf %42, %46 : vector<2x32xf32>
    %49 = arith.addf %47, %48 : vector<2x32xf32>
    %50 = math.tanh %49 : vector<2x32xf32>
    %51 = arith.mulf %44, %50 : vector<2x32xf32>
    %52 = vector.extract_strided_slice %12 {offsets = [4, 0], sizes = [2, 128], strides = [1, 1]} : vector<16x128xf32> to vector<2x128xf32>
    %cst_16 = arith.constant dense<0.000000e+00> : vector<2x128xf32>
    %53 = tpu.matmul %51, %13, %cst_16 {dimension_numbers = #tpu.dot_dimension_numbers<[1], [0], [0], [1], [0, 0, 1, 1], [], []>} : vector<2x32xf32>, vector<32x128xf32>, vector<2x128xf32> -> vector<2x128xf32>
    %54 = arith.addf %52, %53 : vector<2x128xf32>
    %55 = arith.negf %54 : vector<2x128xf32>
    %56 = math.exp %55 : vector<2x128xf32>
    %cst_17 = arith.constant 1.000000e+00 : f32
    %57 = vector.broadcast %cst_17 : f32 to vector<2x128xf32>
    %58 = arith.addf %57, %56 : vector<2x128xf32>
    %59 = arith.divf %57, %58 : vector<2x128xf32>
    %60 = vector.extract_strided_slice %59 {offsets = [0, 0], sizes = [2, 32], strides = [1, 1]} : vector<2x128xf32> to vector<2x32xf32>
    %61 = vector.extract_strided_slice %59 {offsets = [0, 32], sizes = [2, 32], strides = [1, 1]} : vector<2x128xf32> to vector<2x32xf32>
    %62 = vector.extract_strided_slice %59 {offsets = [0, 96], sizes = [2, 32], strides = [1, 1]} : vector<2x128xf32> to vector<2x32xf32>
    %63 = vector.extract_strided_slice %54 {offsets = [0, 64], sizes = [2, 32], strides = [1, 1]} : vector<2x128xf32> to vector<2x32xf32>
    %64 = math.tanh %63 : vector<2x32xf32>
    %65 = arith.mulf %61, %49 : vector<2x32xf32>
    %66 = arith.mulf %60, %64 : vector<2x32xf32>
    %67 = arith.addf %65, %66 : vector<2x32xf32>
    %68 = math.tanh %67 : vector<2x32xf32>
    %69 = arith.mulf %62, %68 : vector<2x32xf32>
    %70 = vector.extract_strided_slice %12 {offsets = [6, 0], sizes = [2, 128], strides = [1, 1]} : vector<16x128xf32> to vector<2x128xf32>
    %cst_18 = arith.constant dense<0.000000e+00> : vector<2x128xf32>
    %71 = tpu.matmul %69, %13, %cst_18 {dimension_numbers = #tpu.dot_dimension_numbers<[1], [0], [0], [1], [0, 0, 1, 1], [], []>} : vector<2x32xf32>, vector<32x128xf32>, vector<2x128xf32> -> vector<2x128xf32>
    %72 = arith.addf %70, %71 : vector<2x128xf32>
    %73 = arith.negf %72 : vector<2x128xf32>
    %74 = math.exp %73 : vector<2x128xf32>
    %cst_19 = arith.constant 1.000000e+00 : f32
    %75 = vector.broadcast %cst_19 : f32 to vector<2x128xf32>
    %76 = arith.addf %75, %74 : vector<2x128xf32>
    %77 = arith.divf %75, %76 : vector<2x128xf32>
    %78 = vector.extract_strided_slice %77 {offsets = [0, 0], sizes = [2, 32], strides = [1, 1]} : vector<2x128xf32> to vector<2x32xf32>
    %79 = vector.extract_strided_slice %77 {offsets = [0, 32], sizes = [2, 32], strides = [1, 1]} : vector<2x128xf32> to vector<2x32xf32>
    %80 = vector.extract_strided_slice %77 {offsets = [0, 96], sizes = [2, 32], strides = [1, 1]} : vector<2x128xf32> to vector<2x32xf32>
    %81 = vector.extract_strided_slice %72 {offsets = [0, 64], sizes = [2, 32], strides = [1, 1]} : vector<2x128xf32> to vector<2x32xf32>
    %82 = math.tanh %81 : vector<2x32xf32>
    %83 = arith.mulf %79, %67 : vector<2x32xf32>
    %84 = arith.mulf %78, %82 : vector<2x32xf32>
    %85 = arith.addf %83, %84 : vector<2x32xf32>
    %86 = math.tanh %85 : vector<2x32xf32>
    %87 = arith.mulf %80, %86 : vector<2x32xf32>
    %88 = vector.extract_strided_slice %12 {offsets = [8, 0], sizes = [2, 128], strides = [1, 1]} : vector<16x128xf32> to vector<2x128xf32>
    %cst_20 = arith.constant dense<0.000000e+00> : vector<2x128xf32>
    %89 = tpu.matmul %87, %13, %cst_20 {dimension_numbers = #tpu.dot_dimension_numbers<[1], [0], [0], [1], [0, 0, 1, 1], [], []>} : vector<2x32xf32>, vector<32x128xf32>, vector<2x128xf32> -> vector<2x128xf32>
    %90 = arith.addf %88, %89 : vector<2x128xf32>
    %91 = arith.negf %90 : vector<2x128xf32>
    %92 = math.exp %91 : vector<2x128xf32>
    %cst_21 = arith.constant 1.000000e+00 : f32
    %93 = vector.broadcast %cst_21 : f32 to vector<2x128xf32>
    %94 = arith.addf %93, %92 : vector<2x128xf32>
    %95 = arith.divf %93, %94 : vector<2x128xf32>
    %96 = vector.extract_strided_slice %95 {offsets = [0, 0], sizes = [2, 32], strides = [1, 1]} : vector<2x128xf32> to vector<2x32xf32>
    %97 = vector.extract_strided_slice %95 {offsets = [0, 32], sizes = [2, 32], strides = [1, 1]} : vector<2x128xf32> to vector<2x32xf32>
    %98 = vector.extract_strided_slice %95 {offsets = [0, 96], sizes = [2, 32], strides = [1, 1]} : vector<2x128xf32> to vector<2x32xf32>
    %99 = vector.extract_strided_slice %90 {offsets = [0, 64], sizes = [2, 32], strides = [1, 1]} : vector<2x128xf32> to vector<2x32xf32>
    %100 = math.tanh %99 : vector<2x32xf32>
    %101 = arith.mulf %97, %85 : vector<2x32xf32>
    %102 = arith.mulf %96, %100 : vector<2x32xf32>
    %103 = arith.addf %101, %102 : vector<2x32xf32>
    %104 = math.tanh %103 : vector<2x32xf32>
    %105 = arith.mulf %98, %104 : vector<2x32xf32>
    %106 = vector.extract_strided_slice %12 {offsets = [10, 0], sizes = [2, 128], strides = [1, 1]} : vector<16x128xf32> to vector<2x128xf32>
    %cst_22 = arith.constant dense<0.000000e+00> : vector<2x128xf32>
    %107 = tpu.matmul %105, %13, %cst_22 {dimension_numbers = #tpu.dot_dimension_numbers<[1], [0], [0], [1], [0, 0, 1, 1], [], []>} : vector<2x32xf32>, vector<32x128xf32>, vector<2x128xf32> -> vector<2x128xf32>
    %108 = arith.addf %106, %107 : vector<2x128xf32>
    %109 = arith.negf %108 : vector<2x128xf32>
    %110 = math.exp %109 : vector<2x128xf32>
    %cst_23 = arith.constant 1.000000e+00 : f32
    %111 = vector.broadcast %cst_23 : f32 to vector<2x128xf32>
    %112 = arith.addf %111, %110 : vector<2x128xf32>
    %113 = arith.divf %111, %112 : vector<2x128xf32>
    %114 = vector.extract_strided_slice %113 {offsets = [0, 0], sizes = [2, 32], strides = [1, 1]} : vector<2x128xf32> to vector<2x32xf32>
    %115 = vector.extract_strided_slice %113 {offsets = [0, 32], sizes = [2, 32], strides = [1, 1]} : vector<2x128xf32> to vector<2x32xf32>
    %116 = vector.extract_strided_slice %113 {offsets = [0, 96], sizes = [2, 32], strides = [1, 1]} : vector<2x128xf32> to vector<2x32xf32>
    %117 = vector.extract_strided_slice %108 {offsets = [0, 64], sizes = [2, 32], strides = [1, 1]} : vector<2x128xf32> to vector<2x32xf32>
    %118 = math.tanh %117 : vector<2x32xf32>
    %119 = arith.mulf %115, %103 : vector<2x32xf32>
    %120 = arith.mulf %114, %118 : vector<2x32xf32>
    %121 = arith.addf %119, %120 : vector<2x32xf32>
    %122 = math.tanh %121 : vector<2x32xf32>
    %123 = arith.mulf %116, %122 : vector<2x32xf32>
    %124 = vector.extract_strided_slice %12 {offsets = [12, 0], sizes = [2, 128], strides = [1, 1]} : vector<16x128xf32> to vector<2x128xf32>
    %cst_24 = arith.constant dense<0.000000e+00> : vector<2x128xf32>
    %125 = tpu.matmul %123, %13, %cst_24 {dimension_numbers = #tpu.dot_dimension_numbers<[1], [0], [0], [1], [0, 0, 1, 1], [], []>} : vector<2x32xf32>, vector<32x128xf32>, vector<2x128xf32> -> vector<2x128xf32>
    %126 = arith.addf %124, %125 : vector<2x128xf32>
    %127 = arith.negf %126 : vector<2x128xf32>
    %128 = math.exp %127 : vector<2x128xf32>
    %cst_25 = arith.constant 1.000000e+00 : f32
    %129 = vector.broadcast %cst_25 : f32 to vector<2x128xf32>
    %130 = arith.addf %129, %128 : vector<2x128xf32>
    %131 = arith.divf %129, %130 : vector<2x128xf32>
    %132 = vector.extract_strided_slice %131 {offsets = [0, 0], sizes = [2, 32], strides = [1, 1]} : vector<2x128xf32> to vector<2x32xf32>
    %133 = vector.extract_strided_slice %131 {offsets = [0, 32], sizes = [2, 32], strides = [1, 1]} : vector<2x128xf32> to vector<2x32xf32>
    %134 = vector.extract_strided_slice %131 {offsets = [0, 96], sizes = [2, 32], strides = [1, 1]} : vector<2x128xf32> to vector<2x32xf32>
    %135 = vector.extract_strided_slice %126 {offsets = [0, 64], sizes = [2, 32], strides = [1, 1]} : vector<2x128xf32> to vector<2x32xf32>
    %136 = math.tanh %135 : vector<2x32xf32>
    %137 = arith.mulf %133, %121 : vector<2x32xf32>
    %138 = arith.mulf %132, %136 : vector<2x32xf32>
    %139 = arith.addf %137, %138 : vector<2x32xf32>
    %140 = math.tanh %139 : vector<2x32xf32>
    %141 = arith.mulf %134, %140 : vector<2x32xf32>
    %142 = vector.extract_strided_slice %12 {offsets = [14, 0], sizes = [2, 128], strides = [1, 1]} : vector<16x128xf32> to vector<2x128xf32>
    %cst_26 = arith.constant dense<0.000000e+00> : vector<2x128xf32>
    %143 = tpu.matmul %141, %13, %cst_26 {dimension_numbers = #tpu.dot_dimension_numbers<[1], [0], [0], [1], [0, 0, 1, 1], [], []>} : vector<2x32xf32>, vector<32x128xf32>, vector<2x128xf32> -> vector<2x128xf32>
    %144 = arith.addf %142, %143 : vector<2x128xf32>
    %145 = arith.negf %144 : vector<2x128xf32>
    %146 = math.exp %145 : vector<2x128xf32>
    %cst_27 = arith.constant 1.000000e+00 : f32
    %147 = vector.broadcast %cst_27 : f32 to vector<2x128xf32>
    %148 = arith.addf %147, %146 : vector<2x128xf32>
    %149 = arith.divf %147, %148 : vector<2x128xf32>
    %150 = vector.extract_strided_slice %149 {offsets = [0, 0], sizes = [2, 32], strides = [1, 1]} : vector<2x128xf32> to vector<2x32xf32>
    %151 = vector.extract_strided_slice %149 {offsets = [0, 32], sizes = [2, 32], strides = [1, 1]} : vector<2x128xf32> to vector<2x32xf32>
    %152 = vector.extract_strided_slice %149 {offsets = [0, 96], sizes = [2, 32], strides = [1, 1]} : vector<2x128xf32> to vector<2x32xf32>
    %153 = vector.extract_strided_slice %144 {offsets = [0, 64], sizes = [2, 32], strides = [1, 1]} : vector<2x128xf32> to vector<2x32xf32>
    %154 = math.tanh %153 : vector<2x32xf32>
    %155 = arith.mulf %151, %139 : vector<2x32xf32>
    %156 = arith.mulf %150, %154 : vector<2x32xf32>
    %157 = arith.addf %155, %156 : vector<2x32xf32>
    %158 = math.tanh %157 : vector<2x32xf32>
    %159 = arith.mulf %152, %158 : vector<2x32xf32>
    %160 = tpu.concatenate %33, %51, %69, %87, %105, %123, %141, %159 in 0 : vector<2x32xf32>, vector<2x32xf32>, vector<2x32xf32>, vector<2x32xf32>, vector<2x32xf32>, vector<2x32xf32>, vector<2x32xf32>, vector<2x32xf32> -> vector<16x32xf32>
    %c0_28 = arith.constant 0 : index
    %c0_29 = arith.constant 0 : index
    %161 = vector.load %arg6[%c0_28, %c0_29] : memref<32x64xf32, #tpu.memory_space<vmem>>, vector<32x64xf32>
    %cst_30 = arith.constant dense<0.000000e+00> : vector<16x64xf32>
    %162 = tpu.matmul %160, %161, %cst_30 {dimension_numbers = #tpu.dot_dimension_numbers<[1], [0], [0], [1], [0, 0, 1, 1], [], []>} : vector<16x32xf32>, vector<32x64xf32>, vector<16x64xf32> -> vector<16x64xf32>
    %c0_31 = arith.constant 0 : index
    %c0_32 = arith.constant 0 : index
    %163 = vector.load %arg7[%c0_31, %c0_32] : memref<1x64xf32, #tpu.memory_space<vmem>>, vector<1x64xf32>
    %164 = vector.broadcast %163 : vector<1x64xf32> to vector<16x64xf32>
    %165 = arith.addf %162, %164 : vector<16x64xf32>
    %c0_33 = arith.constant 0 : index
    %c0_34 = arith.constant 0 : index
    %166 = vector.load %arg8[%c0_33, %c0_34] : memref<16x64xf32, #tpu.memory_space<vmem>>, vector<16x64xf32>
    tpu.vector_store %arg8[%c0_33, %c0_34], %165 {strides = array<i32>} : memref<16x64xf32, #tpu.memory_space<vmem>>, vector<16x64xf32>,
    return
  }
  func.func @transform_0(%arg0: i32) -> (i32, i32) {
    %c0_i32 = arith.constant 0 : i32
    %c0_i32_0 = arith.constant 0 : i32
    return %arg0, %c0_i32 : i32, i32
  }
  func.func @transform_1(%arg0: i32) -> (i32, i32) {
    %c0_i32 = arith.constant 0 : i32
    %c0_i32_0 = arith.constant 0 : i32
    %c0_i32_1 = arith.constant 0 : i32
    return %c0_i32, %c0_i32_0 : i32, i32
  }
  func.func @transform_2(%arg0: i32) -> (i32, i32) {
    %c0_i32 = arith.constant 0 : i32
    %c0_i32_0 = arith.constant 0 : i32
    %c0_i32_1 = arith.constant 0 : i32
    return %c0_i32, %c0_i32_0 : i32, i32
  }
  func.func @transform_3(%arg0: i32) -> (i32, i32) {
    %c0_i32 = arith.constant 0 : i32
    %c0_i32_0 = arith.constant 0 : i32
    %c0_i32_1 = arith.constant 0 : i32
    return %c0_i32, %c0_i32_0 : i32, i32
  }
  func.func @transform_4(%arg0: i32) -> (i32, i32) {
    %c0_i32 = arith.constant 0 : i32
    %c0_i32_0 = arith.constant 0 : i32
    %c0_i32_1 = arith.constant 0 : i32
    return %c0_i32, %c0_i32_0 : i32, i32
  }
  func.func @transform_5(%arg0: i32) -> (i32, i32) {
    %c0_i32 = arith.constant 0 : i32
    %c0_i32_0 = arith.constant 0 : i32
    %c0_i32_1 = arith.constant 0 : i32
    return %c0_i32, %c0_i32_0 : i32, i32
  }
  func.func @transform_6(%arg0: i32) -> (i32, i32) {
    %c0_i32 = arith.constant 0 : i32
    %c0_i32_0 = arith.constant 0 : i32
    %c0_i32_1 = arith.constant 0 : i32
    return %c0_i32, %c0_i32_0 : i32, i32
  }
  func.func @transform_7(%arg0: i32) -> (i32, i32) {
    %c0_i32 = arith.constant 0 : i32
    %c0_i32_0 = arith.constant 0 : i32
    return %arg0, %c0_i32 : i32, i32
  }
}

</mosaic_0001>

<llo_original>
// kernel: tpu_custom_call.1
$region0: #{tpu_custom_call.1}
  #allocation0 [shape = 'u32[]', space=smem, size = 0x4, offset = 0x4, fixed_abs, tag = 'smem constant byte address 0x4 - core index']
  #allocation1 [shape = 'u32[144,128]{1,0:T(1,128)}', space=vmem, size = 0x12000, scoped, tag = 'internal scratch']
  %s0 = inlined_call_operand.vmem [shape: s32[16,1], index: 0, kind: input, shape index: {}]
  %s1 = inlined_call_operand.vmem [shape: f32[64,32], index: 1, kind: input, shape index: {}]
  %s2 = inlined_call_operand.vmem [shape: f32[32,128], index: 2, kind: input, shape index: {}]
  %s3 = inlined_call_operand.vmem [shape: f32[32,128], index: 3, kind: input, shape index: {}]
  %s4 = inlined_call_operand.vmem [shape: f32[1,128], index: 4, kind: input, shape index: {}]
  %s5 = inlined_call_operand.vmem [shape: f32[32,64], index: 5, kind: input, shape index: {}]
  %s6 = inlined_call_operand.vmem [shape: f32[1,64], index: 6, kind: input, shape index: {}]
  %s7 = inlined_call_operand.hbm [shape: f32[16,64], index: 7, kind: output, shape index: {}]
  %s8 = sld [smem:[#allocation0]]
  $region38: #{tpu_custom_call.1} parent=0
    _
  %s10 = ssub.s32 1, %s8
  %s11 = scalar_select 0, %s10, %s8
  $region1: #{tpu_custom_call.1} parent=0
    #allocation2 [shape = 'u8[8192]{0}', space=vmem, size = 0x2000, scoped, tag = 'output window, operand 0, single buffered']
    #allocation3 [shape = 's32[1]{0}', space=sflag, size = 0x4, scoped, tag = 'scoped memory for tpu_custom_call.1']
    %12 = vsyncpa [#allocation3], 0
    // Predicated region
    $region2: #{tpu_custom_call.1} parent=1 // pred_check
      _
    $region3: #{tpu_custom_call.1} parent=1 // pred_check_branch
      %14 = sbr.rel (0) target = $region5
    $region4: #{tpu_custom_call.1} parent=1 // pred_region
      _
    $region5: #{tpu_custom_call.1} parent=1 // pred_fallthru
      _
    // Predicated region
    $region6: #{tpu_custom_call.1} parent=1 // pred_check
      _
    $region7: #{tpu_custom_call.1} parent=1 // pred_check_branch
      %16 = sbr.rel (0) target = $region9
    $region8: #{tpu_custom_call.1} parent=1 // pred_region
      _
    $region9: #{tpu_custom_call.1} parent=1 // pred_fallthru
      _
    // Predicated region
    $region10: #{tpu_custom_call.1} parent=1 // pred_check
      _
    $region11: #{tpu_custom_call.1} parent=1 // pred_check_branch
      %18 = sbr.rel (0) target = $region13
    $region12: #{tpu_custom_call.1} parent=1 // pred_region
      _
    $region13: #{tpu_custom_call.1} parent=1 // pred_fallthru
      _
    // Predicated region
    $region14: #{tpu_custom_call.1} parent=1 // pred_check
      _
    $region15: #{tpu_custom_call.1} parent=1 // pred_check_branch
      %20 = sbr.rel (0) target = $region17
    $region16: #{tpu_custom_call.1} parent=1 // pred_region
      _
    $region17: #{tpu_custom_call.1} parent=1 // pred_fallthru
      _
    // Predicated region
    $region18: #{tpu_custom_call.1} parent=1 // pred_check
      _
    $region19: #{tpu_custom_call.1} parent=1 // pred_check_branch
      %22 = sbr.rel (0) target = $region21
    $region20: #{tpu_custom_call.1} parent=1 // pred_region
      _
    $region21: #{tpu_custom_call.1} parent=1 // pred_fallthru
      _
    // Predicated region
    $region22: #{tpu_custom_call.1} parent=1 // pred_check
      _
    $region23: #{tpu_custom_call.1} parent=1 // pred_check_branch
      %24 = sbr.rel (0) target = $region25
    $region24: #{tpu_custom_call.1} parent=1 // pred_region
      _
    $region25: #{tpu_custom_call.1} parent=1 // pred_fallthru
      _
    // Predicated region
    $region26: #{tpu_custom_call.1} parent=1 // pred_check
      _
    $region27: #{tpu_custom_call.1} parent=1 // pred_check_branch
      %26 = sbr.rel (0) target = $region29
    $region28: #{tpu_custom_call.1} parent=1 // pred_region
      _
    $region29: #{tpu_custom_call.1} parent=1 // pred_fallthru
      _
    %v27 = vld [vmem:[%s0] sm:$0xff]
    %v28 = vld [vmem:[%s0 + $0x8] sm:$0xff]
    %v29 = vlaneseq
    %v30 = vand.u32 %v29, 127
    %31 = vset.pattern.permute.xlu0 0
    %32 = vperm.xlu0 %31, %v27
    %v33 = vpop.permute.xlu0 %32
    %34 = vset.pattern.permute.xlu0 0
    %35 = vperm.xlu0 %34, %v28
    %v36 = vpop.permute.xlu0 %35
    %vm37 = vcmp.eq.s32.totalorder %v30, %v33
    %vm38 = vcmp.eq.s32.totalorder %v30, %v36
    %v39 = vsel %vm37, 1, 0
    %v40 = vsel %vm38, 1, 0
    %v41 = vcvt.s32.f32 %v39
    %v42 = vcvt.s32.f32 %v40
    %v43 = vld [vmem:[%s1] sm:$0xff]
    %v44 = vld [vmem:[%s1 + $0x8] sm:$0xff]
    %v45 = vld [vmem:[%s1 + $0x10] sm:$0xff]
    %v46 = vld [vmem:[%s1 + $0x18] sm:$0xff]
    %v47 = vld [vmem:[%s1 + $0x20] sm:$0xff]
    %v48 = vld [vmem:[%s1 + $0x28] sm:$0xff]
    %v49 = vld [vmem:[%s1 + $0x30] sm:$0xff]
    %v50 = vld [vmem:[%s1 + $0x38] sm:$0xff]
    %vm51 = vcmask 523264
    %v53 = vsel %vm51, %v41, 0
    %v56 = vsel %vm51, %v42, 0
    %58 = vmatprep.subr.mxu0 0.0
    %59 = vmatpush1.msra.mxu0 %v43
    %60 = vmatprep.subr.mxu0 0.0
    %61 = vmatpush1.msra.mxu0 %v44
    %62 = vmatprep.subr.mxu0 0.0
    %63 = vmatpush1.msra.mxu0 %v45
    %64 = vmatprep.subr.mxu0 0.0
    %65 = vmatpush1.msra.mxu0 %v46
    %66 = vmatprep.subr.mxu0 0.0
    %67 = vmatpush1.msra.mxu0 %v47
    %68 = vmatprep.subr.mxu0 0.0
    %69 = vmatpush1.msra.mxu0 %v48
    %70 = vmatprep.subr.mxu0 0.0
    %71 = vmatpush1.msra.mxu0 %v49
    %72 = vmatprep.subr.mxu0 0.0
    %73 = vmatpush1.msra.mxu0 %v50
    %74 = vmatprep.subr.mxu0 0.0
    %75 = vmatpush1.msra.mxu0 0.0
    %76 = vmatprep.subr.mxu0 0.0
    %77 = vmatpush1.msra.mxu0 0.0
    %78 = vmatprep.subr.mxu0 0.0
    %79 = vmatpush1.msra.mxu0 0.0
    %80 = vmatprep.subr.mxu0 0.0
    %81 = vmatpush1.msra.mxu0 0.0
    %82 = vmatprep.subr.mxu0 0.0
    %83 = vmatpush1.msra.mxu0 0.0
    %84 = vmatprep.subr.mxu0 0.0
    %85 = vmatpush1.msra.mxu0 0.0
    %86 = vmatprep.subr.mxu0 0.0
    %87 = vmatpush1.msra.mxu0 0.0
    %88 = vmatprep.subr.mxu0 0.0
    %89 = vmatpush1.msra.mxu0 0.0
    %90 = vmatprep.subr.mxu0 0.0
    %91 = vmatpush1.msra.mxu0 0.0
    %92 = vmatprep.subr.mxu0 0.0
    %93 = vmatpush1.msra.mxu0 0.0
    %94 = vmatprep.subr.mxu0 0.0
    %95 = vmatpush1.msra.mxu0 0.0
    %96 = vmatprep.subr.mxu0 0.0
    %97 = vmatpush1.msra.mxu0 0.0
    %98 = vmatprep.subr.mxu0 0.0
    %99 = vmatpush1.msra.mxu0 0.0
    %100 = vmatprep.subr.mxu0 0.0
    %101 = vmatpush1.msra.mxu0 0.0
    %102 = vmatprep.subr.mxu0 0.0
    %103 = vmatpush1.msra.mxu0 0.0
    %104 = vmatprep.subr.mxu0 0.0
    %105 = vmatpush1.msra.mxu0 0.0
    %106 = vmatprep.subr.mxu0 0.0
    %107 = vmatpush1.msra.mxu0 0.0
    %108 = vmatprep.subr.mxu0 0.0
    %109 = vmatpush1.msra.mxu0 0.0
    %110 = vmatprep.subr.mxu0 0.0
    %111 = vmatpush1.msra.mxu0 0.0
    %112 = vmatprep.subr.mxu0 0.0
    %113 = vmatpush1.msra.mxu0 0.0
    %114 = vmatprep.subr.mxu0 0.0
    %115 = vmatpush1.msra.mxu0 0.0
    %116 = vmatprep.subr.mxu0 0.0
    %117 = vmatpush1.msra.mxu0 0.0
    %118 = vmatprep.subr.mxu0 0.0
    %119 = vmatpush1.msra.mxu0 0.0
    %120 = vmatprep.subr.mxu0 0.0
    %121 = vmatpush1.msra.mxu0 0.0
    %122 = vmatprep.mubr.f32.mxu0 0.0
    %123 = vmatmul.mubr.f32.gmra.mrb[0].mxu0 %v53
    %v124 = vpop.f32.mrb[0].mxu0
    %v125 = vadd.f32 0.0, %v124
    %v126 = vpop.f32.mrb[0].mxu0
    %127 = vmatprep.mubr.f32.mxu0 0.0
    %128 = vmatmul.mubr.f32.gmra.mrb[0].mxu0 %v56
    %v129 = vpop.f32.mrb[0].mxu0
    %v130 = vadd.f32 0.0, %v129
    %v131 = vpop.f32.mrb[0].mxu0
    %132 = vdwg.mxu0
    %v133 = vld [vmem:[%s2] sm:$0xff]
    %v134 = vld [vmem:[%s2 + $0x8] sm:$0xff]
    %v135 = vld [vmem:[%s2 + $0x10] sm:$0xff]
    %v136 = vld [vmem:[%s2 + $0x18] sm:$0xff]
    %v137 = vld [vmem:[%s4] sm:$0x1]
    %v139 = vlaneseq
    %v140 = vshrl.u32 %v139, 7
    %v141 = vsub.s32 0, %v140
    %v142 = vrot.slane %v137, %v141
    %vm144 = vcmask 261120
    %v146 = vsel %vm144, %v125, 0
    %v149 = vsel %vm144, %v130, 0
    %151 = vmatprep.subr.mxu0 0.0
    %152 = vmatpush1.msra.mxu0 %v133
    %153 = vmatprep.subr.mxu0 0.0
    %154 = vmatpush1.msra.mxu0 %v134
    %155 = vmatprep.subr.mxu0 0.0
    %156 = vmatpush1.msra.mxu0 %v135
    %157 = vmatprep.subr.mxu0 0.0
    %158 = vmatpush1.msra.mxu0 %v136
    %159 = vmatprep.subr.mxu0 0.0
    %160 = vmatpush1.msra.mxu0 0.0
    %161 = vmatprep.subr.mxu0 0.0
    %162 = vmatpush1.msra.mxu0 0.0
    %163 = vmatprep.subr.mxu0 0.0
    %164 = vmatpush1.msra.mxu0 0.0
    %165 = vmatprep.subr.mxu0 0.0
    %166 = vmatpush1.msra.mxu0 0.0
    %167 = vmatprep.subr.mxu0 0.0
    %168 = vmatpush1.msra.mxu0 0.0
    %169 = vmatprep.subr.mxu0 0.0
    %170 = vmatpush1.msra.mxu0 0.0
    %171 = vmatprep.subr.mxu0 0.0
    %172 = vmatpush1.msra.mxu0 0.0
    %173 = vmatprep.subr.mxu0 0.0
    %174 = vmatpush1.msra.mxu0 0.0
    %175 = vmatprep.subr.mxu0 0.0
    %176 = vmatpush1.msra.mxu0 0.0
    %177 = vmatprep.subr.mxu0 0.0
    %178 = vmatpush1.msra.mxu0 0.0
    %179 = vmatprep.subr.mxu0 0.0
    %180 = vmatpush1.msra.mxu0 0.0
    %181 = vmatprep.subr.mxu0 0.0
    %182 = vmatpush1.msra.mxu0 0.0
    %183 = vmatprep.subr.mxu0 0.0
    %184 = vmatpush1.msra.mxu0 0.0
    %185 = vmatprep.subr.mxu0 0.0
    %186 = vmatpush1.msra.mxu0 0.0
    %187 = vmatprep.subr.mxu0 0.0
    %188 = vmatpush1.msra.mxu0 0.0
    %189 = vmatprep.subr.mxu0 0.0
    %190 = vmatpush1.msra.mxu0 0.0
    %191 = vmatprep.subr.mxu0 0.0
    %192 = vmatpush1.msra.mxu0 0.0
    %193 = vmatprep.subr.mxu0 0.0
    %194 = vmatpush1.msra.mxu0 0.0
    %195 = vmatprep.subr.mxu0 0.0
    %196 = vmatpush1.msra.mxu0 0.0
    %197 = vmatprep.subr.mxu0 0.0
    %198 = vmatpush1.msra.mxu0 0.0
    %199 = vmatprep.subr.mxu0 0.0
    %200 = vmatpush1.msra.mxu0 0.0
    %201 = vmatprep.subr.mxu0 0.0
    %202 = vmatpush1.msra.mxu0 0.0
    %203 = vmatprep.subr.mxu0 0.0
    %204 = vmatpush1.msra.mxu0 0.0
    %205 = vmatprep.subr.mxu0 0.0
    %206 = vmatpush1.msra.mxu0 0.0
    %207 = vmatprep.subr.mxu0 0.0
    %208 = vmatpush1.msra.mxu0 0.0
    %209 = vmatprep.subr.mxu0 0.0
    %210 = vmatpush1.msra.mxu0 0.0
    %211 = vmatprep.subr.mxu0 0.0
    %212 = vmatpush1.msra.mxu0 0.0
    %213 = vmatprep.subr.mxu0 0.0
    %214 = vmatpush1.msra.mxu0 0.0
    %215 = vmatprep.mubr.f32.mxu0 0.0
    %216 = vmatmul.mubr.f32.gmra.mrb[0].mxu0 %v146
    %v217 = vpop.f32.mrb[0].mxu0
    %v218 = vadd.f32 %v142, %v217
    %v219 = vpop.f32.mrb[0].mxu0
    %220 = vmatprep.mubr.f32.mxu0 0.0
    %221 = vmatmul.mubr.f32.gmra.mrb[0].mxu0 %v149
    %v222 = vpop.f32.mrb[0].mxu0
    %v223 = vadd.f32 %v142, %v222
    %v224 = vpop.f32.mrb[0].mxu0
    %225 = vdwg.mxu0
    %v226 = vld [vmem:[%s3] sm:$0xff]
    %v227 = vld [vmem:[%s3 + $0x8] sm:$0xff]
    %v228 = vld [vmem:[%s3 + $0x10] sm:$0xff]
    %v229 = vld [vmem:[%s3 + $0x18] sm:$0xff]
    %v231 = vsel %vm144, 0.0, 0
    %233 = vmatprep.subr.mxu0 0.0
    %234 = vmatpush1.msra.mxu0 %v226
    %235 = vmatprep.subr.mxu0 0.0
    %236 = vmatpush1.msra.mxu0 %v227
    %237 = vmatprep.subr.mxu0 0.0
    %238 = vmatpush1.msra.mxu0 %v228
    %239 = vmatprep.subr.mxu0 0.0
    %240 = vmatpush1.msra.mxu0 %v229
    %241 = vmatprep.subr.mxu0 0.0
    %242 = vmatpush1.msra.mxu0 0.0
    %243 = vmatprep.subr.mxu0 0.0
    %244 = vmatpush1.msra.mxu0 0.0
    %245 = vmatprep.subr.mxu0 0.0
    %246 = vmatpush1.msra.mxu0 0.0
    %247 = vmatprep.subr.mxu0 0.0
    %248 = vmatpush1.msra.mxu0 0.0
    %249 = vmatprep.subr.mxu0 0.0
    %250 = vmatpush1.msra.mxu0 0.0
    %251 = vmatprep.subr.mxu0 0.0
    %252 = vmatpush1.msra.mxu0 0.0
    %253 = vmatprep.subr.mxu0 0.0
    %254 = vmatpush1.msra.mxu0 0.0
    %255 = vmatprep.subr.mxu0 0.0
    %256 = vmatpush1.msra.mxu0 0.0
    %257 = vmatprep.subr.mxu0 0.0
    %258 = vmatpush1.msra.mxu0 0.0
    %259 = vmatprep.subr.mxu0 0.0
    %260 = vmatpush1.msra.mxu0 0.0
    %261 = vmatprep.subr.mxu0 0.0
    %262 = vmatpush1.msra.mxu0 0.0
    %263 = vmatprep.subr.mxu0 0.0
    %264 = vmatpush1.msra.mxu0 0.0
    %265 = vmatprep.subr.mxu0 0.0
    %266 = vmatpush1.msra.mxu0 0.0
    %267 = vmatprep.subr.mxu0 0.0
    %268 = vmatpush1.msra.mxu0 0.0
    %269 = vmatprep.subr.mxu0 0.0
    %270 = vmatpush1.msra.mxu0 0.0
    %271 = vmatprep.subr.mxu0 0.0
    %272 = vmatpush1.msra.mxu0 0.0
    %273 = vmatprep.subr.mxu0 0.0
    %274 = vmatpush1.msra.mxu0 0.0
    %275 = vmatprep.subr.mxu0 0.0
    %276 = vmatpush1.msra.mxu0 0.0
    %277 = vmatprep.subr.mxu0 0.0
    %278 = vmatpush1.msra.mxu0 0.0
    %279 = vmatprep.subr.mxu0 0.0
    %280 = vmatpush1.msra.mxu0 0.0
    %281 = vmatprep.subr.mxu0 0.0
    %282 = vmatpush1.msra.mxu0 0.0
    %283 = vmatprep.subr.mxu0 0.0
    %284 = vmatpush1.msra.mxu0 0.0
    %285 = vmatprep.subr.mxu0 0.0
    %286 = vmatpush1.msra.mxu0 0.0
    %287 = vmatprep.subr.mxu0 0.0
    %288 = vmatpush1.msra.mxu0 0.0
    %289 = vmatprep.subr.mxu0 0.0
    %290 = vmatpush1.msra.mxu0 0.0
    %291 = vmatprep.subr.mxu0 0.0
    %292 = vmatpush1.msra.mxu0 0.0
    %293 = vmatprep.subr.mxu0 0.0
    %294 = vmatpush1.msra.mxu0 0.0
    %295 = vmatprep.subr.mxu0 0.0
    %296 = vmatpush1.msra.mxu0 0.0
    %297 = vmatprep.mubr.f32.mxu0 0.0
    %298 = vmatmul.mubr.f32.gmra.mrb[0].mxu0 %v231
    %v299 = vpop.f32.mrb[0].mxu0
    %v300 = vadd.f32 0.0, %v299
    %v301 = vpop.f32.mrb[0].mxu0
    %302 = vdwg.mxu0
    %v303 = vadd.f32 %v218, %v300
    %v304 = vxor.u32 %v303, 2147483648
    %v305 = vmul.f32 %v304, 1.442695
    %v306 = vpow.pop %v305
    %v307 = vadd.f32 %v306, 1.0
    %v308 = vrcp.pop %v307
    %v309 = vmul.f32 1.0, %v308
    %v310 = vtanh.pop %v303
    %v311 = vmul.f32 %v309, 0.0
    %313 = vrot.lane.b32.xlu0 %v310, 64
    %v314 = vpop.permute.xlu0 %313
    %v316 = vmul.f32 %v309, %v314
    %318 = vrot.lane.b32.xlu0 %v316, 32
    %v319 = vpop.permute.xlu0 %318
    %v321 = vadd.f32 %v311, %v319
    %v322 = vtanh.pop %v321
    %324 = vrot.lane.b32.xlu0 %v322, 64
    %v325 = vpop.permute.xlu0 %324
    %v327 = vmul.f32 %v309, %v325
    %329 = vrot.lane.b32.xlu0 %v327, 32
    %v330 = vpop.permute.xlu0 %329
    %v331 = vsel %vm144, %v330, 0
    %333 = vmatprep.subr.mxu0 0.0
    %334 = vmatpush1.msra.mxu0 %v226
    %335 = vmatprep.subr.mxu0 0.0
    %336 = vmatpush1.msra.mxu0 %v227
    %337 = vmatprep.subr.mxu0 0.0
    %338 = vmatpush1.msra.mxu0 %v228
    %339 = vmatprep.subr.mxu0 0.0
    %340 = vmatpush1.msra.mxu0 %v229
    %341 = vmatprep.subr.mxu0 0.0
    %342 = vmatpush1.msra.mxu0 0.0
    %343 = vmatprep.subr.mxu0 0.0
    %344 = vmatpush1.msra.mxu0 0.0
    %345 = vmatprep.subr.mxu0 0.0
    %346 = vmatpush1.msra.mxu0 0.0
    %347 = vmatprep.subr.mxu0 0.0
    %348 = vmatpush1.msra.mxu0 0.0
    %349 = vmatprep.subr.mxu0 0.0
    %350 = vmatpush1.msra.mxu0 0.0
    %351 = vmatprep.subr.mxu0 0.0
    %352 = vmatpush1.msra.mxu0 0.0
    %353 = vmatprep.subr.mxu0 0.0
    %354 = vmatpush1.msra.mxu0 0.0
    %355 = vmatprep.subr.mxu0 0.0
    %356 = vmatpush1.msra.mxu0 0.0
    %357 = vmatprep.subr.mxu0 0.0
    %358 = vmatpush1.msra.mxu0 0.0
    %359 = vmatprep.subr.mxu0 0.0
    %360 = vmatpush1.msra.mxu0 0.0
    %361 = vmatprep.subr.mxu0 0.0
    %362 = vmatpush1.msra.mxu0 0.0
    %363 = vmatprep.subr.mxu0 0.0
    %364 = vmatpush1.msra.mxu0 0.0
    %365 = vmatprep.subr.mxu0 0.0
    %366 = vmatpush1.msra.mxu0 0.0
    %367 = vmatprep.subr.mxu0 0.0
    %368 = vmatpush1.msra.mxu0 0.0
    %369 = vmatprep.subr.mxu0 0.0
    %370 = vmatpush1.msra.mxu0 0.0
    %371 = vmatprep.subr.mxu0 0.0
    %372 = vmatpush1.msra.mxu0 0.0
    %373 = vmatprep.subr.mxu0 0.0
    %374 = vmatpush1.msra.mxu0 0.0
    %375 = vmatprep.subr.mxu0 0.0
    %376 = vmatpush1.msra.mxu0 0.0
    %377 = vmatprep.subr.mxu0 0.0
    %378 = vmatpush1.msra.mxu0 0.0
    %379 = vmatprep.subr.mxu0 0.0
    %380 = vmatpush1.msra.mxu0 0.0
    %381 = vmatprep.subr.mxu0 0.0
    %382 = vmatpush1.msra.mxu0 0.0
    %383 = vmatprep.subr.mxu0 0.0
    %384 = vmatpush1.msra.mxu0 0.0
    %385 = vmatprep.subr.mxu0 0.0
    %386 = vmatpush1.msra.mxu0 0.0
    %387 = vmatprep.subr.mxu0 0.0
    %388 = vmatpush1.msra.mxu0 0.0
    %389 = vmatprep.subr.mxu0 0.0
    %390 = vmatpush1.msra.mxu0 0.0
    %391 = vmatprep.subr.mxu0 0.0
    %392 = vmatpush1.msra.mxu0 0.0
    %393 = vmatprep.subr.mxu0 0.0
    %394 = vmatpush1.msra.mxu0 0.0
    %395 = vmatprep.subr.mxu0 0.0
    %396 = vmatpush1.msra.mxu0 0.0
    %397 = vmatprep.mubr.f32.mxu0 0.0
    %398 = vmatmul.mubr.f32.gmra.mrb[0].mxu0 %v331
    %v399 = vpop.f32.mrb[0].mxu0
    %v400 = vadd.f32 0.0, %v399
    %v401 = vpop.f32.mrb[0].mxu0
    %402 = vdwg.mxu0
    %v404 = vrot.slane %v400, 6
    %v406 = vadd.f32 %v218, %v404
    %v407 = vxor.u32 %v406, 2147483648
    %v408 = vmul.f32 %v407, 1.442695
    %v409 = vpow.pop %v408
    %v410 = vadd.f32 %v409, 1.0
    %v411 = vrcp.pop %v410
    %v412 = vmul.f32 1.0, %v411
    %v413 = vtanh.pop %v406
    %v415 = vrot.slane %v321, 6
    %v417 = vmul.f32 %v412, %v415
    %419 = vrot.lane.b32.xlu0 %v413, 64
    %v420 = vpop.permute.xlu0 %419
    %v422 = vmul.f32 %v412, %v420
    %424 = vrot.lane.b32.xlu0 %v422, 32
    %v425 = vpop.permute.xlu0 %424
    %v427 = vadd.f32 %v417, %v425
    %v428 = vtanh.pop %v427
    %430 = vrot.lane.b32.xlu0 %v428, 64
    %v431 = vpop.permute.xlu0 %430
    %v433 = vmul.f32 %v412, %v431
    %v435 = vrot.slane %v433, 2
    %436 = vrot.lane.b32.xlu0 %v435, 32
    %v437 = vpop.permute.xlu0 %436
    %v438 = vsel %vm144, %v437, 0
    %440 = vmatprep.subr.mxu0 0.0
    %441 = vmatpush1.msra.mxu0 %v226
    %442 = vmatprep.subr.mxu0 0.0
    %443 = vmatpush1.msra.mxu0 %v227
    %444 = vmatprep.subr.mxu0 0.0
    %445 = vmatpush1.msra.mxu0 %v228
    %446 = vmatprep.subr.mxu0 0.0
    %447 = vmatpush1.msra.mxu0 %v229
    %448 = vmatprep.subr.mxu0 0.0
    %449 = vmatpush1.msra.mxu0 0.0
    %450 = vmatprep.subr.mxu0 0.0
    %451 = vmatpush1.msra.mxu0 0.0
    %452 = vmatprep.subr.mxu0 0.0
    %453 = vmatpush1.msra.mxu0 0.0
    %454 = vmatprep.subr.mxu0 0.0
    %455 = vmatpush1.msra.mxu0 0.0
    %456 = vmatprep.subr.mxu0 0.0
    %457 = vmatpush1.msra.mxu0 0.0
    %458 = vmatprep.subr.mxu0 0.0
    %459 = vmatpush1.msra.mxu0 0.0
    %460 = vmatprep.subr.mxu0 0.0
    %461 = vmatpush1.msra.mxu0 0.0
    %462 = vmatprep.subr.mxu0 0.0
    %463 = vmatpush1.msra.mxu0 0.0
    %464 = vmatprep.subr.mxu0 0.0
    %465 = vmatpush1.msra.mxu0 0.0
    %466 = vmatprep.subr.mxu0 0.0
    %467 = vmatpush1.msra.mxu0 0.0
    %468 = vmatprep.subr.mxu0 0.0
    %469 = vmatpush1.msra.mxu0 0.0
    %470 = vmatprep.subr.mxu0 0.0
    %471 = vmatpush1.msra.mxu0 0.0
    %472 = vmatprep.subr.mxu0 0.0
    %473 = vmatpush1.msra.mxu0 0.0
    %474 = vmatprep.subr.mxu0 0.0
    %475 = vmatpush1.msra.mxu0 0.0
    %476 = vmatprep.subr.mxu0 0.0
    %477 = vmatpush1.msra.mxu0 0.0
    %478 = vmatprep.subr.mxu0 0.0
    %479 = vmatpush1.msra.mxu0 0.0
    %480 = vmatprep.subr.mxu0 0.0
    %481 = vmatpush1.msra.mxu0 0.0
    %482 = vmatprep.subr.mxu0 0.0
    %483 = vmatpush1.msra.mxu0 0.0
    %484 = vmatprep.subr.mxu0 0.0
    %485 = vmatpush1.msra.mxu0 0.0
    %486 = vmatprep.subr.mxu0 0.0
    %487 = vmatpush1.msra.mxu0 0.0
    %488 = vmatprep.subr.mxu0 0.0
    %489 = vmatpush1.msra.mxu0 0.0
    %490 = vmatprep.subr.mxu0 0.0
    %491 = vmatpush1.msra.mxu0 0.0
    %492 = vmatprep.subr.mxu0 0.0
    %493 = vmatpush1.msra.mxu0 0.0
    %494 = vmatprep.subr.mxu0 0.0
    %495 = vmatpush1.msra.mxu0 0.0
    %496 = vmatprep.subr.mxu0 0.0
    %497 = vmatpush1.msra.mxu0 0.0
    %498 = vmatprep.subr.mxu0 0.0
    %499 = vmatpush1.msra.mxu0 0.0
    %500 = vmatprep.subr.mxu0 0.0
    %501 = vmatpush1.msra.mxu0 0.0
    %502 = vmatprep.subr.mxu0 0.0
    %503 = vmatpush1.msra.mxu0 0.0
    %504 = vmatprep.mubr.f32.mxu0 0.0
    %505 = vmatmul.mubr.f32.gmra.mrb[0].mxu0 %v438
    %v506 = vpop.f32.mrb[0].mxu0
    %v507 = vadd.f32 0.0, %v506
    %v508 = vpop.f32.mrb[0].mxu0
    %509 = vdwg.mxu0
    %v511 = vrot.slane %v507, 4
    %v513 = vadd.f32 %v218, %v511
    %v514 = vxor.u32 %v513, 2147483648
    %v515 = vmul.f32 %v514, 1.442695
    %v516 = vpow.pop %v515
    %v517 = vadd.f32 %v516, 1.0
    %v518 = vrcp.pop %v517
    %v519 = vmul.f32 1.0, %v518
    %v520 = vtanh.pop %v513
    %v522 = vrot.slane %v427, 6
    %v524 = vmul.f32 %v519, %v522
    %526 = vrot.lane.b32.xlu0 %v520, 64
    %v527 = vpop.permute.xlu0 %526
    %v529 = vmul.f32 %v519, %v527
    %531 = vrot.lane.b32.xlu0 %v529, 32
    %v532 = vpop.permute.xlu0 %531
    %v534 = vadd.f32 %v524, %v532
    %v535 = vtanh.pop %v534
    %537 = vrot.lane.b32.xlu0 %v535, 64
    %v538 = vpop.permute.xlu0 %537
    %v540 = vmul.f32 %v519, %v538
    %v542 = vrot.slane %v540, 4
    %543 = vrot.lane.b32.xlu0 %v542, 32
    %v544 = vpop.permute.xlu0 %543
    %v545 = vsel %vm144, %v544, 0
    %547 = vmatprep.subr.mxu0 0.0
    %548 = vmatpush1.msra.mxu0 %v226
    %549 = vmatprep.subr.mxu0 0.0
    %550 = vmatpush1.msra.mxu0 %v227
    %551 = vmatprep.subr.mxu0 0.0
    %552 = vmatpush1.msra.mxu0 %v228
    %553 = vmatprep.subr.mxu0 0.0
    %554 = vmatpush1.msra.mxu0 %v229
    %555 = vmatprep.subr.mxu0 0.0
    %556 = vmatpush1.msra.mxu0 0.0
    %557 = vmatprep.subr.mxu0 0.0
    %558 = vmatpush1.msra.mxu0 0.0
    %559 = vmatprep.subr.mxu0 0.0
    %560 = vmatpush1.msra.mxu0 0.0
    %561 = vmatprep.subr.mxu0 0.0
    %562 = vmatpush1.msra.mxu0 0.0
    %563 = vmatprep.subr.mxu0 0.0
    %564 = vmatpush1.msra.mxu0 0.0
    %565 = vmatprep.subr.mxu0 0.0
    %566 = vmatpush1.msra.mxu0 0.0
    %567 = vmatprep.subr.mxu0 0.0
    %568 = vmatpush1.msra.mxu0 0.0
    %569 = vmatprep.subr.mxu0 0.0
    %570 = vmatpush1.msra.mxu0 0.0
    %571 = vmatprep.subr.mxu0 0.0
    %572 = vmatpush1.msra.mxu0 0.0
    %573 = vmatprep.subr.mxu0 0.0
    %574 = vmatpush1.msra.mxu0 0.0
    %575 = vmatprep.subr.mxu0 0.0
    %576 = vmatpush1.msra.mxu0 0.0
    %577 = vmatprep.subr.mxu0 0.0
    %578 = vmatpush1.msra.mxu0 0.0
    %579 = vmatprep.subr.mxu0 0.0
    %580 = vmatpush1.msra.mxu0 0.0
    %581 = vmatprep.subr.mxu0 0.0
    %582 = vmatpush1.msra.mxu0 0.0
    %583 = vmatprep.subr.mxu0 0.0
    %584 = vmatpush1.msra.mxu0 0.0
    %585 = vmatprep.subr.mxu0 0.0
    %586 = vmatpush1.msra.mxu0 0.0
    %587 = vmatprep.subr.mxu0 0.0
    %588 = vmatpush1.msra.mxu0 0.0
    %589 = vmatprep.subr.mxu0 0.0
    %590 = vmatpush1.msra.mxu0 0.0
    %591 = vmatprep.subr.mxu0 0.0
    %592 = vmatpush1.msra.mxu0 0.0
    %593 = vmatprep.subr.mxu0 0.0
    %594 = vmatpush1.msra.mxu0 0.0
    %595 = vmatprep.subr.mxu0 0.0
    %596 = vmatpush1.msra.mxu0 0.0
    %597 = vmatprep.subr.mxu0 0.0
    %598 = vmatpush1.msra.mxu0 0.0
    %599 = vmatprep.subr.mxu0 0.0
    %600 = vmatpush1.msra.mxu0 0.0
    %601 = vmatprep.subr.mxu0 0.0
    %602 = vmatpush1.msra.mxu0 0.0
    %603 = vmatprep.subr.mxu0 0.0
    %604 = vmatpush1.msra.mxu0 0.0
    %605 = vmatprep.subr.mxu0 0.0
    %606 = vmatpush1.msra.mxu0 0.0
    %607 = vmatprep.subr.mxu0 0.0
    %608 = vmatpush1.msra.mxu0 0.0
    %609 = vmatprep.subr.mxu0 0.0
    %610 = vmatpush1.msra.mxu0 0.0
    %611 = vmatprep.mubr.f32.mxu0 0.0
    %612 = vmatmul.mubr.f32.gmra.mrb[0].mxu0 %v545
    %v613 = vpop.f32.mrb[0].mxu0
    %v614 = vadd.f32 0.0, %v613
    %v615 = vpop.f32.mrb[0].mxu0
    %616 = vdwg.mxu0
    %v618 = vrot.slane %v614, 2
    %v620 = vadd.f32 %v218, %v618
    %v621 = vxor.u32 %v620, 2147483648
    %v622 = vmul.f32 %v621, 1.442695
    %v623 = vpow.pop %v622
    %v624 = vadd.f32 %v623, 1.0
    %v625 = vrcp.pop %v624
    %v626 = vmul.f32 1.0, %v625
    %v627 = vtanh.pop %v620
    %v629 = vrot.slane %v534, 6
    %v631 = vmul.f32 %v626, %v629
    %633 = vrot.lane.b32.xlu0 %v627, 64
    %v634 = vpop.permute.xlu0 %633
    %v636 = vmul.f32 %v626, %v634
    %638 = vrot.lane.b32.xlu0 %v636, 32
    %v639 = vpop.permute.xlu0 %638
    %v641 = vadd.f32 %v631, %v639
    %v642 = vtanh.pop %v641
    %644 = vrot.lane.b32.xlu0 %v642, 64
    %v645 = vpop.permute.xlu0 %644
    %v647 = vmul.f32 %v626, %v645
    %v649 = vrot.slane %v647, 6
    %650 = vrot.lane.b32.xlu0 %v649, 32
    %v651 = vpop.permute.xlu0 %650
    %v652 = vsel %vm144, %v651, 0
    %654 = vmatprep.subr.mxu0 0.0
    %655 = vmatpush1.msra.mxu0 %v226
    %656 = vmatprep.subr.mxu0 0.0
    %657 = vmatpush1.msra.mxu0 %v227
    %658 = vmatprep.subr.mxu0 0.0
    %659 = vmatpush1.msra.mxu0 %v228
    %660 = vmatprep.subr.mxu0 0.0
    %661 = vmatpush1.msra.mxu0 %v229
    %662 = vmatprep.subr.mxu0 0.0
    %663 = vmatpush1.msra.mxu0 0.0
    %664 = vmatprep.subr.mxu0 0.0
    %665 = vmatpush1.msra.mxu0 0.0
    %666 = vmatprep.subr.mxu0 0.0
    %667 = vmatpush1.msra.mxu0 0.0
    %668 = vmatprep.subr.mxu0 0.0
    %669 = vmatpush1.msra.mxu0 0.0
    %670 = vmatprep.subr.mxu0 0.0
    %671 = vmatpush1.msra.mxu0 0.0
    %672 = vmatprep.subr.mxu0 0.0
    %673 = vmatpush1.msra.mxu0 0.0
    %674 = vmatprep.subr.mxu0 0.0
    %675 = vmatpush1.msra.mxu0 0.0
    %676 = vmatprep.subr.mxu0 0.0
    %677 = vmatpush1.msra.mxu0 0.0
    %678 = vmatprep.subr.mxu0 0.0
    %679 = vmatpush1.msra.mxu0 0.0
    %680 = vmatprep.subr.mxu0 0.0
    %681 = vmatpush1.msra.mxu0 0.0
    %682 = vmatprep.subr.mxu0 0.0
    %683 = vmatpush1.msra.mxu0 0.0
    %684 = vmatprep.subr.mxu0 0.0
    %685 = vmatpush1.msra.mxu0 0.0
    %686 = vmatprep.subr.mxu0 0.0
    %687 = vmatpush1.msra.mxu0 0.0
    %688 = vmatprep.subr.mxu0 0.0
    %689 = vmatpush1.msra.mxu0 0.0
    %690 = vmatprep.subr.mxu0 0.0
    %691 = vmatpush1.msra.mxu0 0.0
    %692 = vmatprep.subr.mxu0 0.0
    %693 = vmatpush1.msra.mxu0 0.0
    %694 = vmatprep.subr.mxu0 0.0
    %695 = vmatpush1.msra.mxu0 0.0
    %696 = vmatprep.subr.mxu0 0.0
    %697 = vmatpush1.msra.mxu0 0.0
    %698 = vmatprep.subr.mxu0 0.0
    %699 = vmatpush1.msra.mxu0 0.0
    %700 = vmatprep.subr.mxu0 0.0
    %701 = vmatpush1.msra.mxu0 0.0
    %702 = vmatprep.subr.mxu0 0.0
    %703 = vmatpush1.msra.mxu0 0.0
    %704 = vmatprep.subr.mxu0 0.0
    %705 = vmatpush1.msra.mxu0 0.0
    %706 = vmatprep.subr.mxu0 0.0
    %707 = vmatpush1.msra.mxu0 0.0
    %708 = vmatprep.subr.mxu0 0.0
    %709 = vmatpush1.msra.mxu0 0.0
    %710 = vmatprep.subr.mxu0 0.0
    %711 = vmatpush1.msra.mxu0 0.0
    %712 = vmatprep.subr.mxu0 0.0
    %713 = vmatpush1.msra.mxu0 0.0
    %714 = vmatprep.subr.mxu0 0.0
    %715 = vmatpush1.msra.mxu0 0.0
    %716 = vmatprep.subr.mxu0 0.0
    %717 = vmatpush1.msra.mxu0 0.0
    %718 = vmatprep.mubr.f32.mxu0 0.0
    %719 = vmatmul.mubr.f32.gmra.mrb[0].mxu0 %v652
    %v720 = vpop.f32.mrb[0].mxu0
    %v721 = vadd.f32 0.0, %v720
    %v722 = vpop.f32.mrb[0].mxu0
    %723 = vdwg.mxu0
    %v724 = vadd.f32 %v223, %v721
    %v725 = vxor.u32 %v724, 2147483648
    %v726 = vmul.f32 %v725, 1.442695
    %v727 = vpow.pop %v726
    %v728 = vadd.f32 %v727, 1.0
    %v729 = vrcp.pop %v728
    %v730 = vmul.f32 1.0, %v729
    %v731 = vtanh.pop %v724
    %v733 = vrot.slane %v641, 6
    %v735 = vmul.f32 %v730, %v733
    %737 = vrot.lane.b32.xlu0 %v731, 64
    %v738 = vpop.permute.xlu0 %737
    %v740 = vmul.f32 %v730, %v738
    %742 = vrot.lane.b32.xlu0 %v740, 32
    %v743 = vpop.permute.xlu0 %742
    %v745 = vadd.f32 %v735, %v743
    %v746 = vtanh.pop %v745
    %748 = vrot.lane.b32.xlu0 %v746, 64
    %v749 = vpop.permute.xlu0 %748
    %v751 = vmul.f32 %v730, %v749
    %753 = vrot.lane.b32.xlu0 %v751, 32
    %v754 = vpop.permute.xlu0 %753
    %v755 = vsel %vm144, %v754, 0
    %757 = vmatprep.subr.mxu0 0.0
    %758 = vmatpush1.msra.mxu0 %v226
    %759 = vmatprep.subr.mxu0 0.0
    %760 = vmatpush1.msra.mxu0 %v227
    %761 = vmatprep.subr.mxu0 0.0
    %762 = vmatpush1.msra.mxu0 %v228
    %763 = vmatprep.subr.mxu0 0.0
    %764 = vmatpush1.msra.mxu0 %v229
    %765 = vmatprep.subr.mxu0 0.0
    %766 = vmatpush1.msra.mxu0 0.0
    %767 = vmatprep.subr.mxu0 0.0
    %768 = vmatpush1.msra.mxu0 0.0
    %769 = vmatprep.subr.mxu0 0.0
    %770 = vmatpush1.msra.mxu0 0.0
    %771 = vmatprep.subr.mxu0 0.0
    %772 = vmatpush1.msra.mxu0 0.0
    %773 = vmatprep.subr.mxu0 0.0
    %774 = vmatpush1.msra.mxu0 0.0
    %775 = vmatprep.subr.mxu0 0.0
    %776 = vmatpush1.msra.mxu0 0.0
    %777 = vmatprep.subr.mxu0 0.0
    %778 = vmatpush1.msra.mxu0 0.0
    %779 = vmatprep.subr.mxu0 0.0
    %780 = vmatpush1.msra.mxu0 0.0
    %781 = vmatprep.subr.mxu0 0.0
    %782 = vmatpush1.msra.mxu0 0.0
    %783 = vmatprep.subr.mxu0 0.0
    %784 = vmatpush1.msra.mxu0 0.0
    %785 = vmatprep.subr.mxu0 0.0
    %786 = vmatpush1.msra.mxu0 0.0
    %787 = vmatprep.subr.mxu0 0.0
    %788 = vmatpush1.msra.mxu0 0.0
    %789 = vmatprep.subr.mxu0 0.0
    %790 = vmatpush1.msra.mxu0 0.0
    %791 = vmatprep.subr.mxu0 0.0
    %792 = vmatpush1.msra.mxu0 0.0
    %793 = vmatprep.subr.mxu0 0.0
    %794 = vmatpush1.msra.mxu0 0.0
    %795 = vmatprep.subr.mxu0 0.0
    %796 = vmatpush1.msra.mxu0 0.0
    %797 = vmatprep.subr.mxu0 0.0
    %798 = vmatpush1.msra.mxu0 0.0
    %799 = vmatprep.subr.mxu0 0.0
    %800 = vmatpush1.msra.mxu0 0.0
    %801 = vmatprep.subr.mxu0 0.0
    %802 = vmatpush1.msra.mxu0 0.0
    %803 = vmatprep.subr.mxu0 0.0
    %804 = vmatpush1.msra.mxu0 0.0
    %805 = vmatprep.subr.mxu0 0.0
    %806 = vmatpush1.msra.mxu0 0.0
    %807 = vmatprep.subr.mxu0 0.0
    %808 = vmatpush1.msra.mxu0 0.0
    %809 = vmatprep.subr.mxu0 0.0
    %810 = vmatpush1.msra.mxu0 0.0
    %811 = vmatprep.subr.mxu0 0.0
    %812 = vmatpush1.msra.mxu0 0.0
    %813 = vmatprep.subr.mxu0 0.0
    %814 = vmatpush1.msra.mxu0 0.0
    %815 = vmatprep.subr.mxu0 0.0
    %816 = vmatpush1.msra.mxu0 0.0
    %817 = vmatprep.subr.mxu0 0.0
    %818 = vmatpush1.msra.mxu0 0.0
    %819 = vmatprep.subr.mxu0 0.0
    %820 = vmatpush1.msra.mxu0 0.0
    %821 = vmatprep.mubr.f32.mxu0 0.0
    %822 = vmatmul.mubr.f32.gmra.mrb[0].mxu0 %v755
    %v823 = vpop.f32.mrb[0].mxu0
    %v824 = vadd.f32 0.0, %v823
    %v825 = vpop.f32.mrb[0].mxu0
    %826 = vdwg.mxu0
    %v828 = vrot.slane %v824, 6
    %v830 = vadd.f32 %v223, %v828
    %v831 = vxor.u32 %v830, 2147483648
    %v832 = vmul.f32 %v831, 1.442695
    %v833 = vpow.pop %v832
    %v834 = vadd.f32 %v833, 1.0
    %v835 = vrcp.pop %v834
    %v836 = vmul.f32 1.0, %v835
    %v837 = vtanh.pop %v830
    %v839 = vrot.slane %v745, 6
    %v841 = vmul.f32 %v836, %v839
    %843 = vrot.lane.b32.xlu0 %v837, 64
    %v844 = vpop.permute.xlu0 %843
    %v846 = vmul.f32 %v836, %v844
    %848 = vrot.lane.b32.xlu0 %v846, 32
    %v849 = vpop.permute.xlu0 %848
    %v851 = vadd.f32 %v841, %v849
    %v852 = vtanh.pop %v851
    %854 = vrot.lane.b32.xlu0 %v852, 64
    %v855 = vpop.permute.xlu0 %854
    %v857 = vmul.f32 %v836, %v855
    %v859 = vrot.slane %v857, 2
    %860 = vrot.lane.b32.xlu0 %v859, 32
    %v861 = vpop.permute.xlu0 %860
    %v862 = vsel %vm144, %v861, 0
    %864 = vmatprep.subr.mxu0 0.0
    %865 = vmatpush1.msra.mxu0 %v226
    %866 = vmatprep.subr.mxu0 0.0
    %867 = vmatpush1.msra.mxu0 %v227
    %868 = vmatprep.subr.mxu0 0.0
    %869 = vmatpush1.msra.mxu0 %v228
    %870 = vmatprep.subr.mxu0 0.0
    %871 = vmatpush1.msra.mxu0 %v229
    %872 = vmatprep.subr.mxu0 0.0
    %873 = vmatpush1.msra.mxu0 0.0
    %874 = vmatprep.subr.mxu0 0.0
    %875 = vmatpush1.msra.mxu0 0.0
    %876 = vmatprep.subr.mxu0 0.0
    %877 = vmatpush1.msra.mxu0 0.0
    %878 = vmatprep.subr.mxu0 0.0
    %879 = vmatpush1.msra.mxu0 0.0
    %880 = vmatprep.subr.mxu0 0.0
    %881 = vmatpush1.msra.mxu0 0.0
    %882 = vmatprep.subr.mxu0 0.0
    %883 = vmatpush1.msra.mxu0 0.0
    %884 = vmatprep.subr.mxu0 0.0
    %885 = vmatpush1.msra.mxu0 0.0
    %886 = vmatprep.subr.mxu0 0.0
    %887 = vmatpush1.msra.mxu0 0.0
    %888 = vmatprep.subr.mxu0 0.0
    %889 = vmatpush1.msra.mxu0 0.0
    %890 = vmatprep.subr.mxu0 0.0
    %891 = vmatpush1.msra.mxu0 0.0
    %892 = vmatprep.subr.mxu0 0.0
    %893 = vmatpush1.msra.mxu0 0.0
    %894 = vmatprep.subr.mxu0 0.0
    %895 = vmatpush1.msra.mxu0 0.0
    %896 = vmatprep.subr.mxu0 0.0
    %897 = vmatpush1.msra.mxu0 0.0
    %898 = vmatprep.subr.mxu0 0.0
    %899 = vmatpush1.msra.mxu0 0.0
    %900 = vmatprep.subr.mxu0 0.0
    %901 = vmatpush1.msra.mxu0 0.0
    %902 = vmatprep.subr.mxu0 0.0
    %903 = vmatpush1.msra.mxu0 0.0
    %904 = vmatprep.subr.mxu0 0.0
    %905 = vmatpush1.msra.mxu0 0.0
    %906 = vmatprep.subr.mxu0 0.0
    %907 = vmatpush1.msra.mxu0 0.0
    %908 = vmatprep.subr.mxu0 0.0
    %909 = vmatpush1.msra.mxu0 0.0
    %910 = vmatprep.subr.mxu0 0.0
    %911 = vmatpush1.msra.mxu0 0.0
    %912 = vmatprep.subr.mxu0 0.0
    %913 = vmatpush1.msra.mxu0 0.0
    %914 = vmatprep.subr.mxu0 0.0
    %915 = vmatpush1.msra.mxu0 0.0
    %916 = vmatprep.subr.mxu0 0.0
    %917 = vmatpush1.msra.mxu0 0.0
    %918 = vmatprep.subr.mxu0 0.0
    %919 = vmatpush1.msra.mxu0 0.0
    %920 = vmatprep.subr.mxu0 0.0
    %921 = vmatpush1.msra.mxu0 0.0
    %922 = vmatprep.subr.mxu0 0.0
    %923 = vmatpush1.msra.mxu0 0.0
    %924 = vmatprep.subr.mxu0 0.0
    %925 = vmatpush1.msra.mxu0 0.0
    %926 = vmatprep.subr.mxu0 0.0
    %927 = vmatpush1.msra.mxu0 0.0
    %928 = vmatprep.mubr.f32.mxu0 0.0
    %929 = vmatmul.mubr.f32.gmra.mrb[0].mxu0 %v862
    %v930 = vpop.f32.mrb[0].mxu0
    %v931 = vadd.f32 0.0, %v930
    %v932 = vpop.f32.mrb[0].mxu0
    %933 = vdwg.mxu0
    %v935 = vrot.slane %v931, 4
    %v937 = vadd.f32 %v223, %v935
    %v938 = vxor.u32 %v937, 2147483648
    %v939 = vmul.f32 %v938, 1.442695
    %v940 = vpow.pop %v939
    %v941 = vadd.f32 %v940, 1.0
    %v942 = vrcp.pop %v941
    %v943 = vmul.f32 1.0, %v942
    %v944 = vtanh.pop %v937
    %v946 = vrot.slane %v851, 6
    %v948 = vmul.f32 %v943, %v946
    %950 = vrot.lane.b32.xlu0 %v944, 64
    %v951 = vpop.permute.xlu0 %950
    %v953 = vmul.f32 %v943, %v951
    %955 = vrot.lane.b32.xlu0 %v953, 32
    %v956 = vpop.permute.xlu0 %955
    %v958 = vadd.f32 %v948, %v956
    %v959 = vtanh.pop %v958
    %961 = vrot.lane.b32.xlu0 %v959, 64
    %v962 = vpop.permute.xlu0 %961
    %v964 = vmul.f32 %v943, %v962
    %v966 = vrot.slane %v964, 4
    %967 = vrot.lane.b32.xlu0 %v966, 32
    %v968 = vpop.permute.xlu0 %967
    %v969 = vsel %vm144, %v968, 0
    %971 = vmatprep.subr.mxu0 0.0
    %972 = vmatpush1.msra.mxu0 %v226
    %973 = vmatprep.subr.mxu0 0.0
    %974 = vmatpush1.msra.mxu0 %v227
    %975 = vmatprep.subr.mxu0 0.0
    %976 = vmatpush1.msra.mxu0 %v228
    %977 = vmatprep.subr.mxu0 0.0
    %978 = vmatpush1.msra.mxu0 %v229
    %979 = vmatprep.subr.mxu0 0.0
    %980 = vmatpush1.msra.mxu0 0.0
    %981 = vmatprep.subr.mxu0 0.0
    %982 = vmatpush1.msra.mxu0 0.0
    %983 = vmatprep.subr.mxu0 0.0
    %984 = vmatpush1.msra.mxu0 0.0
    %985 = vmatprep.subr.mxu0 0.0
    %986 = vmatpush1.msra.mxu0 0.0
    %987 = vmatprep.subr.mxu0 0.0
    %988 = vmatpush1.msra.mxu0 0.0
    %989 = vmatprep.subr.mxu0 0.0
    %990 = vmatpush1.msra.mxu0 0.0
    %991 = vmatprep.subr.mxu0 0.0
    %992 = vmatpush1.msra.mxu0 0.0
    %993 = vmatprep.subr.mxu0 0.0
    %994 = vmatpush1.msra.mxu0 0.0
    %995 = vmatprep.subr.mxu0 0.0
    %996 = vmatpush1.msra.mxu0 0.0
    %997 = vmatprep.subr.mxu0 0.0
    %998 = vmatpush1.msra.mxu0 0.0
    %999 = vmatprep.subr.mxu0 0.0
    %1000 = vmatpush1.msra.mxu0 0.0
    %1001 = vmatprep.subr.mxu0 0.0
    %1002 = vmatpush1.msra.mxu0 0.0
    %1003 = vmatprep.subr.mxu0 0.0
    %1004 = vmatpush1.msra.mxu0 0.0
    %1005 = vmatprep.subr.mxu0 0.0
    %1006 = vmatpush1.msra.mxu0 0.0
    %1007 = vmatprep.subr.mxu0 0.0
    %1008 = vmatpush1.msra.mxu0 0.0
    %1009 = vmatprep.subr.mxu0 0.0
    %1010 = vmatpush1.msra.mxu0 0.0
    %1011 = vmatprep.subr.mxu0 0.0
    %1012 = vmatpush1.msra.mxu0 0.0
    %1013 = vmatprep.subr.mxu0 0.0
    %1014 = vmatpush1.msra.mxu0 0.0
    %1015 = vmatprep.subr.mxu0 0.0
    %1016 = vmatpush1.msra.mxu0 0.0
    %1017 = vmatprep.subr.mxu0 0.0
    %1018 = vmatpush1.msra.mxu0 0.0
    %1019 = vmatprep.subr.mxu0 0.0
    %1020 = vmatpush1.msra.mxu0 0.0
    %1021 = vmatprep.subr.mxu0 0.0
    %1022 = vmatpush1.msra.mxu0 0.0
    %1023 = vmatprep.subr.mxu0 0.0
    %1024 = vmatpush1.msra.mxu0 0.0
    %1025 = vmatprep.subr.mxu0 0.0
    %1026 = vmatpush1.msra.mxu0 0.0
    %1027 = vmatprep.subr.mxu0 0.0
    %1028 = vmatpush1.msra.mxu0 0.0
    %1029 = vmatprep.subr.mxu0 0.0
    %1030 = vmatpush1.msra.mxu0 0.0
    %1031 = vmatprep.subr.mxu0 0.0
    %1032 = vmatpush1.msra.mxu0 0.0
    %1033 = vmatprep.subr.mxu0 0.0
    %1034 = vmatpush1.msra.mxu0 0.0
    %1035 = vmatprep.mubr.f32.mxu0 0.0
    %1036 = vmatmul.mubr.f32.gmra.mrb[0].mxu0 %v969
    %v1037 = vpop.f32.mrb[0].mxu0
    %v1038 = vadd.f32 0.0, %v1037
    %v1039 = vpop.f32.mrb[0].mxu0
    %1040 = vdwg.mxu0
    %v1042 = vrot.slane %v1038, 2
    %v1044 = vadd.f32 %v223, %v1042
    %v1045 = vxor.u32 %v1044, 2147483648
    %v1046 = vmul.f32 %v1045, 1.442695
    %v1047 = vpow.pop %v1046
    %v1048 = vadd.f32 %v1047, 1.0
    %v1049 = vrcp.pop %v1048
    %v1050 = vmul.f32 1.0, %v1049
    %v1051 = vtanh.pop %v1044
    %v1053 = vrot.slane %v958, 6
    %v1055 = vmul.f32 %v1050, %v1053
    %1057 = vrot.lane.b32.xlu0 %v1051, 64
    %v1058 = vpop.permute.xlu0 %1057
    %v1060 = vmul.f32 %v1050, %v1058
    %1062 = vrot.lane.b32.xlu0 %v1060, 32
    %v1063 = vpop.permute.xlu0 %1062
    %v1065 = vadd.f32 %v1055, %v1063
    %v1066 = vtanh.pop %v1065
    %1068 = vrot.lane.b32.xlu0 %v1066, 64
    %v1069 = vpop.permute.xlu0 %1068
    %v1071 = vmul.f32 %v1050, %v1069
    %vm1072 = vcmask 1041408
    %v1073 = vsel %vm1072, %v327, %v433
    %vm1074 = vcmask 1043456
    %v1075 = vsel %vm1074, %v1073, %v540
    %vm1076 = vcmask 1045504
    %v1077 = vsel %vm1076, %v1075, %v647
    %v1078 = vsel %vm1072, %v751, %v857
    %v1079 = vsel %vm1074, %v1078, %v964
    %v1080 = vsel %vm1076, %v1079, %v1071
    %v1081 = vld [vmem:[%s5] sm:$0xff]
    %v1082 = vld [vmem:[%s5 + $0x8] sm:$0xff]
    %v1083 = vld [vmem:[%s5 + $0x10] sm:$0xff]
    %v1084 = vld [vmem:[%s5 + $0x18] sm:$0xff]
    %v1085 = vld [vmem:[%s6] sm:$0x1]
    %v1087 = vlaneseq
    %v1088 = vshrl.u32 %v1087, 7
    %v1089 = vsub.s32 0, %v1088
    %v1090 = vrot.slane %v1085, %v1089
    %1094 = vrot.lane.b32.xlu0 %v1077, 32
    %v1095 = vpop.permute.xlu0 %1094
    %1096 = vrot.lane.b32.xlu0 %v1080, 32
    %v1097 = vpop.permute.xlu0 %1096
    %v1098 = vsel %vm144, %v1095, 0
    %v1100 = vsel %vm144, %v1097, 0
    %1102 = vmatprep.subr.mxu0 0.0
    %1103 = vmatpush1.msra.mxu0 %v1081
    %1104 = vmatprep.subr.mxu0 0.0
    %1105 = vmatpush1.msra.mxu0 %v1082
    %1106 = vmatprep.subr.mxu0 0.0
    %1107 = vmatpush1.msra.mxu0 %v1083
    %1108 = vmatprep.subr.mxu0 0.0
    %1109 = vmatpush1.msra.mxu0 %v1084
    %1110 = vmatprep.subr.mxu0 0.0
    %1111 = vmatpush1.msra.mxu0 0.0
    %1112 = vmatprep.subr.mxu0 0.0
    %1113 = vmatpush1.msra.mxu0 0.0
    %1114 = vmatprep.subr.mxu0 0.0
    %1115 = vmatpush1.msra.mxu0 0.0
    %1116 = vmatprep.subr.mxu0 0.0
    %1117 = vmatpush1.msra.mxu0 0.0
    %1118 = vmatprep.subr.mxu0 0.0
    %1119 = vmatpush1.msra.mxu0 0.0
    %1120 = vmatprep.subr.mxu0 0.0
    %1121 = vmatpush1.msra.mxu0 0.0
    %1122 = vmatprep.subr.mxu0 0.0
    %1123 = vmatpush1.msra.mxu0 0.0
    %1124 = vmatprep.subr.mxu0 0.0
    %1125 = vmatpush1.msra.mxu0 0.0
    %1126 = vmatprep.subr.mxu0 0.0
    %1127 = vmatpush1.msra.mxu0 0.0
    %1128 = vmatprep.subr.mxu0 0.0
    %1129 = vmatpush1.msra.mxu0 0.0
    %1130 = vmatprep.subr.mxu0 0.0
    %1131 = vmatpush1.msra.mxu0 0.0
    %1132 = vmatprep.subr.mxu0 0.0
    %1133 = vmatpush1.msra.mxu0 0.0
    %1134 = vmatprep.subr.mxu0 0.0
    %1135 = vmatpush1.msra.mxu0 0.0
    %1136 = vmatprep.subr.mxu0 0.0
    %1137 = vmatpush1.msra.mxu0 0.0
    %1138 = vmatprep.subr.mxu0 0.0
    %1139 = vmatpush1.msra.mxu0 0.0
    %1140 = vmatprep.subr.mxu0 0.0
    %1141 = vmatpush1.msra.mxu0 0.0
    %1142 = vmatprep.subr.mxu0 0.0
    %1143 = vmatpush1.msra.mxu0 0.0
    %1144 = vmatprep.subr.mxu0 0.0
    %1145 = vmatpush1.msra.mxu0 0.0
    %1146 = vmatprep.subr.mxu0 0.0
    %1147 = vmatpush1.msra.mxu0 0.0
    %1148 = vmatprep.subr.mxu0 0.0
    %1149 = vmatpush1.msra.mxu0 0.0
    %1150 = vmatprep.subr.mxu0 0.0
    %1151 = vmatpush1.msra.mxu0 0.0
    %1152 = vmatprep.subr.mxu0 0.0
    %1153 = vmatpush1.msra.mxu0 0.0
    %1154 = vmatprep.subr.mxu0 0.0
    %1155 = vmatpush1.msra.mxu0 0.0
    %1156 = vmatprep.subr.mxu0 0.0
    %1157 = vmatpush1.msra.mxu0 0.0
    %1158 = vmatprep.subr.mxu0 0.0
    %1159 = vmatpush1.msra.mxu0 0.0
    %1160 = vmatprep.subr.mxu0 0.0
    %1161 = vmatpush1.msra.mxu0 0.0
    %1162 = vmatprep.subr.mxu0 0.0
    %1163 = vmatpush1.msra.mxu0 0.0
    %1164 = vmatprep.subr.mxu0 0.0
    %1165 = vmatpush1.msra.mxu0 0.0
    %1166 = vmatprep.mubr.f32.mxu0 0.0
    %1167 = vmatmul.mubr.f32.gmra.mrb[0].mxu0 %v1098
    %v1168 = vpop.f32.mrb[0].mxu0
    %v1169 = vadd.f32 %v1090, %v1168
    %v1170 = vpop.f32.mrb[0].mxu0
    %1171 = vmatprep.mubr.f32.mxu0 0.0
    %1172 = vmatmul.mubr.f32.gmra.mrb[0].mxu0 %v1100
    %v1173 = vpop.f32.mrb[0].mxu0
    %v1174 = vadd.f32 %v1090, %v1173
    %v1175 = vpop.f32.mrb[0].mxu0
    %1176 = vdwg.mxu0
    %1177 = vst.msk [vmem:[#allocation2] sm:$0xff] %vm51, %v1169
    %1178 = vst.msk [vmem:[#allocation2 + $0x8] sm:$0xff] %vm51, %v1174
    // Predicated region
    $region30: #{tpu_custom_call.1} parent=1 // pred_check
      _
    $region31: #{tpu_custom_call.1} parent=1 // pred_check_branch
      %1180 = sbr.rel (0) target = $region33
    $region32: #{tpu_custom_call.1} parent=1 // pred_region
      %s1182 = ssub.s32 256, 256
      %1183 = vsyncadd [#allocation3], %s1182
      %s1184 = sshll.u32 [#allocation2], 4
      %s1185 = int_to_ptr.vmem [resolvable:$true] %s1184
      %1190 = dma.vmem_to_hbm [thread:$0]  %s1185, 256, %s7, [#allocation3], 128, 128, 8
    $region33: #{tpu_custom_call.1} parent=1 // pred_fallthru
      _
    // Predicated region
    $region34: #{tpu_custom_call.1} parent=1 // pred_check
      _
    $region35: #{tpu_custom_call.1} parent=1 // pred_check_branch
      %1192 = sbr.rel (0) target = $region37
    $region36: #{tpu_custom_call.1} parent=1 // pred_region
      %1193 = dma.done [#allocation3], 256
    $region37: #{tpu_custom_call.1} parent=1 // pred_fallthru
      _
    %1194 = vsyncpa [#allocation3], 1

</llo_original>
